<compile_context>
chip_gen: v5e
topology: v5e:2x2
jax: 0.10.0
libtpu: 0.0.40
codegen_flags: <defaults>
</compile_context>

<pallas_src>
import functools

import jax
import jax.numpy as jnp
from jax import lax
from jax.experimental import pallas as pl
from jax.experimental.pallas import tpu as pltpu

_LANE = 128


def _gce_kernel(logits_ref, target_ref, out_ref, *, q, num_classes, hw,
                tile_s, s_tiles, need_mask):
    # logits_ref: (1, C, tile_s, 128)  pred dtype (f32 or bf16)
    # target_ref: (1, tile_s, 128)     int8 or int32
    # out_ref:    (1, 1, 1, 128)       f32 lane partial sums
    C = num_classes
    t = target_ref[0].astype(jnp.int32)                       # (tile_s, 128)

    # ---- pass 1 (native dtype): running channel max + gather target logit
    x0 = logits_ref[0, 0]
    m = x0
    x_t = x0                                                   # target class 0 default
    for c in range(1, C):
        x_c = logits_ref[0, c]
        m = jnp.maximum(m, x_c)
        x_t = jnp.where(t == c, x_c, x_t)
    m = m.astype(jnp.float32)
    x_t = x_t.astype(jnp.float32)

    # ---- pass 2: softmax denominator (re-reads come from VMEM, not HBM)
    denom = jnp.zeros(m.shape, jnp.float32)
    for c in range(C):
        denom = denom + jnp.exp(logits_ref[0, c].astype(jnp.float32) - m)

    # ---- GCE per-pixel loss: (1 - p_t^q)/q, p_t^q = exp(q*(x_t - m - log(denom)))
    qf = jnp.float32(q)
    inv_q = jnp.float32(1.0 / q)
    loss = (1.0 - jnp.exp(qf * (x_t - m - jnp.log(denom)))) * inv_q  # (tile_s, 128)

    def write(l):
        out_ref[...] = jnp.sum(l, axis=0)[None, None, None, :]

    if need_mask:
        s_idx = pl.program_id(1)
        is_last = s_idx == s_tiles - 1

        @pl.when(is_last)
        def _():
            # zero out pixels beyond the valid H*W range (partial tile / lane pad)
            row = lax.broadcasted_iota(jnp.int32, loss.shape, 0) + s_idx * tile_s
            lane = lax.broadcasted_iota(jnp.int32, loss.shape, 1)
            write(jnp.where(row * _LANE + lane < hw, loss, 0.0))

        @pl.when(jnp.logical_not(is_last))
        def _():
            write(loss)
    else:
        write(loss)


def generalized_cross_entropy_loss(pred, target, q=0.7, ignore_index=None,
                                    block_bytes=8 * 1024 * 1024):
    """pred: (N, C, H, W) float logits; target: (N, H, W) int class indices."""
    assert ignore_index is None, "ignore_index path not implemented in kernel"
    N, C, H, W = pred.shape
    HW = H * W
    P = N * HW

    # ---- free reshapes: NCHW logits -> (N, C, S, 128), target -> (N, S, 128)
    logits = pred.reshape(N, C, HW)
    # int8 targets when they fit: 1/4 of the int32 HBM traffic (valid class
    # indices < 128 never truncate; widened back to int32 inside the kernel).
    tgt_dtype = jnp.int8 if C <= 127 else jnp.int32
    tgt = target.reshape(N, HW).astype(tgt_dtype)
    HW_pad = pl.cdiv(HW, _LANE) * _LANE
    if HW_pad != HW:
        # rare fallback (H*W not a multiple of 128): one lane-pad copy
        logits = jnp.pad(logits, ((0, 0), (0, 0), (0, HW_pad - HW)))
        tgt = jnp.pad(tgt, ((0, 0), (0, HW_pad - HW)))
    S = HW_pad // _LANE
    logits = logits.reshape(N, C, S, _LANE)
    tgt = tgt.reshape(N, S, _LANE)

    # ---- dtype-aware tiling of the sublane (S) axis
    itemsize = jnp.dtype(pred.dtype).itemsize
    align = 32  # covers f32 (8), bf16 (16) and int8 target (32) sublane packing
    budget_s = (block_bytes // (itemsize * C * _LANE)) // align * align
    pix_cap = (2 * 1024 * 1024) // (4 * _LANE)  # keep f32 pixel-tile temps <= 2 MiB
    budget_s = max(align, min(budget_s, pix_cap))
    tile_s = S if S <= budget_s else budget_s
    s_tiles = pl.cdiv(S, tile_s)

    need_mask = (HW_pad != HW) or (S % tile_s != 0)

    kernel = functools.partial(
        _gce_kernel, q=float(q), num_classes=C, hw=HW, tile_s=tile_s,
        s_tiles=s_tiles, need_mask=need_mask)

    partials = pl.pallas_call(
        kernel,
        out_shape=jax.ShapeDtypeStruct((N, s_tiles, 1, _LANE), jnp.float32),
        grid_spec=pltpu.PrefetchScalarGridSpec(
            num_scalar_prefetch=0,
            grid=(N, s_tiles),
            in_specs=[
                pl.BlockSpec((1, C, tile_s, _LANE), lambda n, s: (n, 0, s, 0)),
                pl.BlockSpec((1, tile_s, _LANE), lambda n, s: (n, s, 0)),
            ],
            out_specs=pl.BlockSpec((1, 1, 1, _LANE), lambda n, s: (n, s, 0, 0)),
        ),
        compiler_params=pltpu.CompilerParams(
            dimension_semantics=("parallel", "parallel"),
            vmem_limit_bytes=48 * 1024 * 1024,
        ),
    )(logits, tgt)

    # tiny final reduction + mean in XLA (tree-sum of per-step lane partials)
    return jnp.sum(partials) / jnp.float32(P)


def _reference(pred, target, q=0.7):
    p = jax.nn.softmax(pred, axis=1)                              # (N,C,H,W)
    p_t = jnp.take_along_axis(p, target[:, None], axis=1)[:, 0]   # (N,H,W)
    return jnp.mean((1.0 - jnp.power(p_t, q)) / q)


if __name__ == "__main__":
    key = jax.random.PRNGKey(0)
    k1, k2 = jax.random.split(key)
    N, C, H, W = 2, 4, 16, 16
    pred = jax.random.normal(k1, (N, C, H, W), dtype=jnp.float32)
    target = jax.random.randint(k2, (N, H, W), 0, C, dtype=jnp.int32)

    loss = generalized_cross_entropy_loss(pred, target, q=0.7)
    loss = jax.block_until_ready(loss)

    ref = _reference(pred, target, q=0.7)
    assert jnp.allclose(loss, ref, atol=1e-5, rtol=1e-5), (loss, ref)
    print("KERNEL_OK")
</pallas_src>

<mosaic_0001>
module attributes {stable_mosaic.version = 11 : i64} {
  func.func @_gce_kernel(%arg0: i32, %arg1: i32, %arg2: memref<1x4x2x128xf32, #tpu.memory_space<vmem>>, %arg3: memref<1x2x128xi8, #tpu.memory_space<vmem>>, %arg4: memref<1x1x1x128xf32, #tpu.memory_space<vmem>>) attributes {dimension_semantics = [#tpu.dimension_semantics<parallel>, #tpu.dimension_semantics<parallel>], iteration_bounds = array<i64: 2, 1>, scalar_prefetch = 0 : i64, scratch_operands = 0 : i64, tpu.core_type = #tpu.core_type<tc>, window_params = [{transform_indices = @transform_0, window_bounds = array<i64: 1, 4, 2, 128>}, {transform_indices = @transform_1, window_bounds = array<i64: 1, 2, 128>}, {transform_indices = @transform_2, window_bounds = array<i64: 1, 1, 1, 128>}]} {
    %c0 = arith.constant 0 : index
    %c0_0 = arith.constant 0 : index
    %c0_1 = arith.constant 0 : index
    %0 = vector.load %arg3[%c0, %c0_0, %c0_1] : memref<1x2x128xi8, #tpu.memory_space<vmem>>, vector<1x2x128xi8>
    %1 = vector.shape_cast %0 : vector<1x2x128xi8> to vector<2x128xi8>
    %2 = arith.extsi %1 : vector<2x128xi8> to vector<2x128xi32>
    %c0_2 = arith.constant 0 : index
    %c0_3 = arith.constant 0 : index
    %c0_4 = arith.constant 0 : index
    %c0_5 = arith.constant 0 : index
    %3 = vector.load %arg2[%c0_2, %c0_3, %c0_4, %c0_5] : memref<1x4x2x128xf32, #tpu.memory_space<vmem>>, vector<1x1x2x128xf32>
    %4 = vector.shape_cast %3 : vector<1x1x2x128xf32> to vector<2x128xf32>
    %c0_6 = arith.constant 0 : index
    %c1 = arith.constant 1 : index
    %c0_7 = arith.constant 0 : index
    %c0_8 = arith.constant 0 : index
    %5 = vector.load %arg2[%c0_6, %c1, %c0_7, %c0_8] : memref<1x4x2x128xf32, #tpu.memory_space<vmem>>, vector<1x1x2x128xf32>
    %6 = vector.shape_cast %5 : vector<1x1x2x128xf32> to vector<2x128xf32>
    %7 = arith.maximumf %4, %6 : vector<2x128xf32>
    %c1_i32 = arith.constant 1 : i32
    %8 = vector.broadcast %c1_i32 : i32 to vector<2x128xi32>
    %9 = arith.cmpi eq, %2, %8 : vector<2x128xi32>
    %10 = arith.select %9, %6, %4 : vector<2x128xi1>, vector<2x128xf32>
    %c0_9 = arith.constant 0 : index
    %c2 = arith.constant 2 : index
    %c0_10 = arith.constant 0 : index
    %c0_11 = arith.constant 0 : index
    %11 = vector.load %arg2[%c0_9, %c2, %c0_10, %c0_11] : memref<1x4x2x128xf32, #tpu.memory_space<vmem>>, vector<1x1x2x128xf32>
    %12 = vector.shape_cast %11 : vector<1x1x2x128xf32> to vector<2x128xf32>
    %13 = arith.maximumf %7, %12 : vector<2x128xf32>
    %c2_i32 = arith.constant 2 : i32
    %14 = vector.broadcast %c2_i32 : i32 to vector<2x128xi32>
    %15 = arith.cmpi eq, %2, %14 : vector<2x128xi32>
    %16 = arith.select %15, %12, %10 : vector<2x128xi1>, vector<2x128xf32>
    %c0_12 = arith.constant 0 : index
    %c3 = arith.constant 3 : index
    %c0_13 = arith.constant 0 : index
    %c0_14 = arith.constant 0 : index
    %17 = vector.load %arg2[%c0_12, %c3, %c0_13, %c0_14] : memref<1x4x2x128xf32, #tpu.memory_space<vmem>>, vector<1x1x2x128xf32>
    %18 = vector.shape_cast %17 : vector<1x1x2x128xf32> to vector<2x128xf32>
    %19 = arith.maximumf %13, %18 : vector<2x128xf32>
    %c3_i32 = arith.constant 3 : i32
    %20 = vector.broadcast %c3_i32 : i32 to vector<2x128xi32>
    %21 = arith.cmpi eq, %2, %20 : vector<2x128xi32>
    %22 = arith.select %21, %18, %16 : vector<2x128xi1>, vector<2x128xf32>
    %cst = arith.constant 0.000000e+00 : f32
    %23 = vector.broadcast %cst : f32 to vector<2x128xf32>
    %c0_15 = arith.constant 0 : index
    %c0_16 = arith.constant 0 : index
    %c0_17 = arith.constant 0 : index
    %c0_18 = arith.constant 0 : index
    %24 = vector.load %arg2[%c0_15, %c0_16, %c0_17, %c0_18] : memref<1x4x2x128xf32, #tpu.memory_space<vmem>>, vector<1x1x2x128xf32>
    %25 = vector.shape_cast %24 : vector<1x1x2x128xf32> to vector<2x128xf32>
    %26 = arith.subf %25, %19 : vector<2x128xf32>
    %27 = math.exp %26 : vector<2x128xf32>
    %28 = arith.addf %23, %27 : vector<2x128xf32>
    %c0_19 = arith.constant 0 : index
    %c1_20 = arith.constant 1 : index
    %c0_21 = arith.constant 0 : index
    %c0_22 = arith.constant 0 : index
    %29 = vector.load %arg2[%c0_19, %c1_20, %c0_21, %c0_22] : memref<1x4x2x128xf32, #tpu.memory_space<vmem>>, vector<1x1x2x128xf32>
    %30 = vector.shape_cast %29 : vector<1x1x2x128xf32> to vector<2x128xf32>
    %31 = arith.subf %30, %19 : vector<2x128xf32>
    %32 = math.exp %31 : vector<2x128xf32>
    %33 = arith.addf %28, %32 : vector<2x128xf32>
    %c0_23 = arith.constant 0 : index
    %c2_24 = arith.constant 2 : index
    %c0_25 = arith.constant 0 : index
    %c0_26 = arith.constant 0 : index
    %34 = vector.load %arg2[%c0_23, %c2_24, %c0_25, %c0_26] : memref<1x4x2x128xf32, #tpu.memory_space<vmem>>, vector<1x1x2x128xf32>
    %35 = vector.shape_cast %34 : vector<1x1x2x128xf32> to vector<2x128xf32>
    %36 = arith.subf %35, %19 : vector<2x128xf32>
    %37 = math.exp %36 : vector<2x128xf32>
    %38 = arith.addf %33, %37 : vector<2x128xf32>
    %c0_27 = arith.constant 0 : index
    %c3_28 = arith.constant 3 : index
    %c0_29 = arith.constant 0 : index
    %c0_30 = arith.constant 0 : index
    %39 = vector.load %arg2[%c0_27, %c3_28, %c0_29, %c0_30] : memref<1x4x2x128xf32, #tpu.memory_space<vmem>>, vector<1x1x2x128xf32>
    %40 = vector.shape_cast %39 : vector<1x1x2x128xf32> to vector<2x128xf32>
    %41 = arith.subf %40, %19 : vector<2x128xf32>
    %42 = math.exp %41 : vector<2x128xf32>
    %43 = arith.addf %38, %42 : vector<2x128xf32>
    %44 = arith.subf %22, %19 : vector<2x128xf32>
    %45 = math.log %43 : vector<2x128xf32>
    %46 = arith.subf %44, %45 : vector<2x128xf32>
    %cst_31 = arith.constant 0.699999988 : f32
    %47 = vector.broadcast %cst_31 : f32 to vector<2x128xf32>
    %48 = arith.mulf %47, %46 : vector<2x128xf32>
    %49 = math.exp %48 : vector<2x128xf32>
    %cst_32 = arith.constant 1.000000e+00 : f32
    %50 = vector.broadcast %cst_32 : f32 to vector<2x128xf32>
    %51 = arith.subf %50, %49 : vector<2x128xf32>
    %cst_33 = arith.constant 1.42857146 : f32
    %52 = vector.broadcast %cst_33 : f32 to vector<2x128xf32>
    %53 = arith.mulf %51, %52 : vector<2x128xf32>
    %cst_34 = arith.constant dense<0.000000e+00> : vector<128xf32>
    %54 = vector.multi_reduction <add>, %53, %cst_34 [0] : vector<2x128xf32> to vector<128xf32>
    %55 = vector.shape_cast %54 : vector<128xf32> to vector<1x1x1x128xf32>
    %c0_35 = arith.constant 0 : index
    %c0_36 = arith.constant 0 : index
    %c0_37 = arith.constant 0 : index
    %c0_38 = arith.constant 0 : index
    %56 = vector.load %arg4[%c0_35, %c0_36, %c0_37, %c0_38] : memref<1x1x1x128xf32, #tpu.memory_space<vmem>>, vector<1x1x1x128xf32>
    tpu.vector_store %arg4[%c0_35, %c0_36, %c0_37, %c0_38], %55 {strides = array<i32>} : memref<1x1x1x128xf32, #tpu.memory_space<vmem>>, vector<1x1x1x128xf32>,
    return
  }
  func.func @transform_0(%arg0: i32, %arg1: i32) -> (i32, i32, i32, i32) {
    %c0_i32 = arith.constant 0 : i32
    %c0_i32_0 = arith.constant 0 : i32
    %c0_i32_1 = arith.constant 0 : i32
    return %arg0, %c0_i32, %arg1, %c0_i32_0 : i32, i32, i32, i32
  }
  func.func @transform_1(%arg0: i32, %arg1: i32) -> (i32, i32, i32) {
    %c0_i32 = arith.constant 0 : i32
    %c0_i32_0 = arith.constant 0 : i32
    return %arg0, %arg1, %c0_i32 : i32, i32, i32
  }
  func.func @transform_2(%arg0: i32, %arg1: i32) -> (i32, i32, i32, i32) {
    %c0_i32 = arith.constant 0 : i32
    %c0_i32_0 = arith.constant 0 : i32
    %c0_i32_1 = arith.constant 0 : i32
    return %arg0, %arg1, %c0_i32, %c0_i32_0 : i32, i32, i32, i32
  }
}

</mosaic_0001>

<llo_original>
// kernel: tpu_custom_call.1
$region0: #{tpu_custom_call.1}
  #allocation0 [shape = 'u32[]', space=smem, size = 0x4, offset = 0x4, fixed_abs, tag = 'smem constant byte address 0x4 - core index']
  #allocation1 [shape = 'u32[72,128]{1,0:T(1,128)}', space=vmem, size = 0x9000, scoped, tag = 'internal scratch']
  %s0 = inlined_call_operand.hbm [shape: f32[2,4,2,128], index: 0, kind: input, shape index: {}]
  %s1 = inlined_call_operand.hbm [shape: s8[2,2,128], index: 1, kind: input, shape index: {}]
  %s2 = inlined_call_operand.hbm [shape: f32[2,1,1,128], index: 2, kind: output, shape index: {}]
  %s3 = sld [smem:[#allocation0]]
  $region49: #{tpu_custom_call.1} parent=0
    _
  %s5 = ssub.s32 1, %s3
  %s6 = scalar_select 0, %s5, %s3
  $region1: #{tpu_custom_call.1} parent=0
    #allocation2 [shape = 'u8[8192]{0}', space=vmem, size = 0x2000, scoped, tag = 'input window, operand 0']
    #allocation3 [shape = 's32[2]{0}', space=sflag, size = 0x8, scoped, tag = 'scoped memory for tpu_custom_call.1']
    #allocation4 [shape = 's32[2]{0}', space=sflag, size = 0x8, scoped, tag = 'scoped memory for tpu_custom_call.1']
    #allocation5 [shape = 'u8[1024]{0}', space=vmem, size = 0x400, scoped, tag = 'input window, operand 1']
    #allocation6 [shape = 's32[2]{0}', space=sflag, size = 0x8, scoped, tag = 'scoped memory for tpu_custom_call.1']
    #allocation7 [shape = 'u8[1024]{0}', space=vmem, size = 0x400, scoped, tag = 'output window, operand 0']
    %7 = vsyncpa [#allocation3], 0
    %s8 = scalar_lea.sflag [#allocation3], 1
    %9 = vsyncpa %s8, 0
    %10 = vsyncpa [#allocation6], 0
    %s11 = scalar_lea.sflag [#allocation6], 1
    %12 = vsyncpa %s11, 0
    %13 = vsyncpa [#allocation4], 0
    %s14 = scalar_lea.sflag [#allocation4], 1
    %15 = vsyncpa %s14, 0
    loop: start=0, step=1, limit=4
    $region2: #{tpu_custom_call.1} parent=1 // loop_pre_header
      _
    $region3: #{tpu_custom_call.1} parent=1 // loop_header
      %s17 = sphi 0, %s21
      %p18 = scmp.ge.s32.totalorder %s17, 4
      %s24 = sphi 0, %s36
      %s25 = sphi 0, %s32
      %s26 = sphi 0, %s24
      %s27 = sphi 0, %s25
      %s28 = sphi 0, %s26
      %s29 = sphi 0, %s27
      %s41 = sphi 0, %s43
      %s44 = sphi 0, %s41
      %s45 = sphi 0, %s44
      %s61 = sphi 0, %s45
      %s69 = sphi 0, %s71
      %s72 = sphi 0, %s69
      %s73 = sphi 0, %s72
      %s89 = sphi 0, %s73
      %s97 = sphi 0, %s99
      %s100 = sphi 0, %s97
      %s101 = sphi 0, %s100
      %s117 = sphi 0, %s101
    $region4: #{tpu_custom_call.1} parent=1 // loop_header_branch
      %20 = sbr.rel (%p18) target = $region8
    $region5: #{tpu_custom_call.1} parent=1 // loop_body
      %s22 = ssub.s32 %s17, 1
      %s23 = ssub.s32 %s17, 2
      %s30 = sadd.s32 1, %s25
      %p31 = scmp.ge.s32.totalorder %s30, 1
      %s32 = scalar_select %p31, 0, %s30
      %s33 = sadd.s32 1, %s24
      %s34 = scalar_select %p31, %s33, %s24
      %p35 = scmp.ge.s32.totalorder %s34, 2
      %s36 = scalar_select %p35, 0, %s34
      %s37 = ssub.s32 %s24, %s36
      %s38 = ssub.s32 %s25, %s32
      %s39 = sor.u32 %s37, %s38
      %p40 = scmp.eq.s32.totalorder %s39, 0
      %s42 = sadd.s32 %s41, 1
      %s43 = scalar_select %p40, %s41, %s42
      %p46 = pneg %p40
      %p47 = scmp.eq.s32.totalorder %s17, 1
      %p48 = por %p46, %p47
      %p49 = scmp.ne.s32.totalorder %s41, %s44
      %p50 = scmp.eq.s32.totalorder %s17, 0
      %p51 = por %p49, %p50
      %p52 = scmp.ne.s32.totalorder %s41, %s44
      %p53 = scmp.eq.s32.totalorder %s22, 1
      %p54 = por %p52, %p53
      %p55 = scmp.ne.s32.totalorder %s44, %s45
      %p56 = scmp.eq.s32.totalorder %s22, 0
      %p57 = por %p55, %p56
      %p58 = scmp.ne.s32.totalorder %s44, %s45
      %p59 = scmp.eq.s32.totalorder %s23, 1
      %p60 = por %p58, %p59
      %p62 = scmp.ne.s32.totalorder %s45, %s61
      %p63 = scmp.eq.s32.totalorder %s23, 0
      %p64 = por %p62, %p63
      %s65 = ssub.s32 %s24, %s36
      %s66 = ssub.s32 %s25, %s32
      %s67 = sor.u32 %s65, %s66
      %p68 = scmp.eq.s32.totalorder %s67, 0
      %s70 = sadd.s32 %s69, 1
      %s71 = scalar_select %p68, %s69, %s70
      %p74 = pneg %p68
      %p75 = scmp.eq.s32.totalorder %s17, 1
      %p76 = por %p74, %p75
      %p77 = scmp.ne.s32.totalorder %s69, %s72
      %p78 = scmp.eq.s32.totalorder %s17, 0
      %p79 = por %p77, %p78
      %p80 = scmp.ne.s32.totalorder %s69, %s72
      %p81 = scmp.eq.s32.totalorder %s22, 1
      %p82 = por %p80, %p81
      %p83 = scmp.ne.s32.totalorder %s72, %s73
      %p84 = scmp.eq.s32.totalorder %s22, 0
      %p85 = por %p83, %p84
      %p86 = scmp.ne.s32.totalorder %s72, %s73
      %p87 = scmp.eq.s32.totalorder %s23, 1
      %p88 = por %p86, %p87
      %p90 = scmp.ne.s32.totalorder %s73, %s89
      %p91 = scmp.eq.s32.totalorder %s23, 0
      %p92 = por %p90, %p91
      %s93 = ssub.s32 %s24, %s36
      %s94 = ssub.s32 %s25, %s32
      %s95 = sor.u32 %s93, %s94
      %p96 = scmp.eq.s32.totalorder %s95, 0
      %s98 = sadd.s32 %s97, 1
      %s99 = scalar_select %p96, %s97, %s98
      %p102 = pneg %p96
      %p103 = scmp.eq.s32.totalorder %s17, 1
      %p104 = por %p102, %p103
      %p105 = scmp.ne.s32.totalorder %s97, %s100
      %p106 = scmp.eq.s32.totalorder %s17, 0
      %p107 = por %p105, %p106
      %p108 = scmp.ne.s32.totalorder %s97, %s100
      %p109 = scmp.eq.s32.totalorder %s22, 1
      %p110 = por %p108, %p109
      %p111 = scmp.ne.s32.totalorder %s100, %s101
      %p112 = scmp.eq.s32.totalorder %s22, 0
      %p113 = por %p111, %p112
      %p114 = scmp.ne.s32.totalorder %s100, %s101
      %p115 = scmp.eq.s32.totalorder %s23, 1
      %p116 = por %p114, %p115
      %p118 = scmp.ne.s32.totalorder %s101, %s117
      %p119 = scmp.eq.s32.totalorder %s23, 0
      %p120 = por %p118, %p119
      %p121 = scmp.le.s32.totalorder 1, %s17
      %p122 = scmp.lt.s32.totalorder %s17, 3
      %p123 = pnand %p121, %p122
      %p124 = pneg %p123
      // Predicated region
      $region9: #{tpu_custom_call.1} parent=5 // pred_check
        _
      $region10: #{tpu_custom_call.1} parent=5 // pred_check_branch
        %126 = sbr.rel (%p123) target = $region12
      $region11: #{tpu_custom_call.1} parent=5 // pred_region
        %s127 = ssub.s32 %s17, 1
      $region12: #{tpu_custom_call.1} parent=5 // pred_fallthru
        _
      %p128 = scmp.lt.s32.totalorder %s17, 2
      // Predicated region
      $region13: #{tpu_custom_call.1} parent=5 // pred_check
        %p129 = pneg %p128
      $region14: #{tpu_custom_call.1} parent=5 // pred_check_branch
        %131 = sbr.rel (%p129) target = $region16
      $region15: #{tpu_custom_call.1} parent=5 // pred_region
        // Predicated region
        $region17: #{tpu_custom_call.1} parent=15 // pred_check
          %p132 = pneg %p51
        $region18: #{tpu_custom_call.1} parent=15 // pred_check_branch
          %134 = sbr.rel (%p132) target = $region20
        $region19: #{tpu_custom_call.1} parent=15 // pred_region
          %s135 = sand.u32 %s41, 1
          %s136 = scalar_lea.sflag [#allocation3], %s135
          %s137 = sand.u32 %s41, 1
          %s138 = smul.addr %s137, 8
          %s139 = scalar_lea.vmem [#allocation2], %s138
          %141 = vsyncadd %s136, 0
          %s142 = smul.addr %s24, 4
          %s143 = sadd.s32 %s25, %s142
          %s144 = smul.addr %s143, 2
          %s145 = scalar_lea.hbm %s0, %s144
          %s146 = sshll.u32 %s145, 4
          %s147 = int_to_ptr.hbm [resolvable:$true] %s146
          %s148 = sshll.u32 %s139, 4
          %s149 = int_to_ptr.vmem [resolvable:$true] %s148
          %154 = dma.hbm_to_vmem [thread:$0]  %s147, 128, %s149, %s136, 32, 32, 2
        $region20: #{tpu_custom_call.1} parent=15 // pred_fallthru
          _
        // Predicated region
        $region21: #{tpu_custom_call.1} parent=15 // pred_check
          %p155 = pneg %p79
        $region22: #{tpu_custom_call.1} parent=15 // pred_check_branch
          %157 = sbr.rel (%p155) target = $region24
        $region23: #{tpu_custom_call.1} parent=15 // pred_region
          %s158 = sand.u32 %s69, 1
          %s159 = scalar_lea.sflag [#allocation6], %s158
          %s160 = sand.u32 %s69, 1
          %s161 = scalar_lea.vmem [#allocation5], %s160
          %163 = vsyncadd %s159, 0
          %s164 = sadd.s32 %s25, %s24
          %s165 = scalar_lea.hbm %s1, %s164
          %s167 = sshll.u32 %s165, 4
          %s168 = int_to_ptr.hbm [resolvable:$true] %s167
          %s169 = sshll.u32 %s161, 4
          %s170 = int_to_ptr.vmem [resolvable:$true] %s169
          %172 = dma.hbm_to_vmem [thread:$0]  %s168, 16, %s170, %s159
        $region24: #{tpu_custom_call.1} parent=15 // pred_fallthru
          _
      $region16: #{tpu_custom_call.1} parent=5 // pred_fallthru
        _
      %p173 = scmp.le.s32.totalorder 1, %s17
      %p174 = scmp.lt.s32.totalorder %s17, 3
      %p175 = pnand %p173, %p174
      %p176 = pneg %p175
      // Predicated region
      $region25: #{tpu_custom_call.1} parent=5 // pred_check
        _
      $region26: #{tpu_custom_call.1} parent=5 // pred_check_branch
        %178 = sbr.rel (%p175) target = $region28
      $region27: #{tpu_custom_call.1} parent=5 // pred_region
        %s179 = ssub.s32 %s17, 1
        %s180 = sand.u32 %s44, 1
        %s181 = scalar_lea.sflag [#allocation3], %s180
        %s182 = sand.u32 %s44, 1
        %s183 = smul.addr %s182, 8
        %s184 = scalar_lea.vmem [#allocation2], %s183
        // Predicated region
        $region29: #{tpu_custom_call.1} parent=27 // pred_check
          %p185 = pneg %p57
        $region30: #{tpu_custom_call.1} parent=27 // pred_check_branch
          %187 = sbr.rel (%p185) target = $region32
        $region31: #{tpu_custom_call.1} parent=27 // pred_region
          %189 = dma.done %s181, 128
        $region32: #{tpu_custom_call.1} parent=27 // pred_fallthru
          _
        %s190 = sand.u32 %s72, 1
        %s191 = scalar_lea.sflag [#allocation6], %s190
        %s192 = sand.u32 %s72, 1
        %s193 = scalar_lea.vmem [#allocation5], %s192
        // Predicated region
        $region33: #{tpu_custom_call.1} parent=27 // pred_check
          %p194 = pneg %p85
        $region34: #{tpu_custom_call.1} parent=27 // pred_check_branch
          %196 = sbr.rel (%p194) target = $region36
        $region35: #{tpu_custom_call.1} parent=27 // pred_region
          %198 = dma.done %s191, 16
        $region36: #{tpu_custom_call.1} parent=27 // pred_fallthru
          _
        %s199 = sand.u32 %s44, 1
        %s200 = scalar_lea.sflag [#allocation3], %s199
        %s201 = sand.u32 %s44, 1
        %s202 = smul.addr %s201, 8
        %s203 = scalar_lea.vmem [#allocation2], %s202
        %p204 = pneg %p57
        %p205 = pneg %p54
        %s206 = sand.u32 %s72, 1
        %s207 = scalar_lea.sflag [#allocation6], %s206
        %s208 = sand.u32 %s72, 1
        %s209 = scalar_lea.vmem [#allocation5], %s208
        %p210 = pneg %p85
        %p211 = pneg %p82
        %p212 = pneg %p113
        %p213 = pneg %p110
        %s214 = sand.u32 %s100, 1
        %s215 = scalar_lea.sflag [#allocation4], %s214
        %s216 = sand.u32 %s100, 1
        %s217 = scalar_lea.vmem [#allocation7], %s216
        %v218 = vld [vmem:[%s193] sm:$0x1]
        %v219 = vunpack.c.0.s8 %v218
        %v220 = vld [vmem:[%s184] sm:$0x3]
        %s221 = scalar_lea.vmem %s184, 2 [#allocation2]
        %v222 = vld [vmem:[%s221] sm:$0x3]
        %v223 = vmax.f32 %v220, %v222
        %vm224 = vcmp.eq.s32.totalorder %v219, 1
        %v225 = vsel %vm224, %v222, %v220
        %s226 = scalar_lea.vmem %s184, 4 [#allocation2]
        %v227 = vld [vmem:[%s226] sm:$0x3]
        %v228 = vmax.f32 %v223, %v227
        %vm229 = vcmp.eq.s32.totalorder %v219, 2
        %v230 = vsel %vm229, %v227, %v225
        %s231 = scalar_lea.vmem %s184, 6 [#allocation2]
        %v232 = vld [vmem:[%s231] sm:$0x3]
        %v233 = vmax.f32 %v228, %v232
        %vm234 = vcmp.eq.s32.totalorder %v219, 3
        %v235 = vsel %vm234, %v232, %v230
        %v236 = vsub.f32 %v220, %v233
        %v237 = vmul.f32 %v236, 1.442695
        %v238 = vpow.pop %v237
        %v239 = vadd.f32 %v238, 0.0
        %v240 = vsub.f32 %v222, %v233
        %v241 = vmul.f32 %v240, 1.442695
        %v242 = vpow.pop %v241
        %v243 = vadd.f32 %v239, %v242
        %v244 = vsub.f32 %v227, %v233
        %v245 = vmul.f32 %v244, 1.442695
        %v246 = vpow.pop %v245
        %v247 = vadd.f32 %v243, %v246
        %v248 = vsub.f32 %v232, %v233
        %v249 = vmul.f32 %v248, 1.442695
        %v250 = vpow.pop %v249
        %v251 = vadd.f32 %v247, %v250
        %v252 = vsub.f32 %v235, %v233
        %v253 = vlog2.pop %v251
        %v254 = vmul.f32 %v253, 0.6931472
        %v255 = vsub.f32 %v252, %v254
        %v256 = vmul.f32 %v255, 0.7
        %v257 = vmul.f32 %v256, 1.442695
        %v258 = vpow.pop %v257
        %v259 = vsub.f32 1.0, %v258
        %v260 = vmul.f32 %v259, 1.4285715
        %vm261 = vcmask 1041408
        %v262 = vsel %vm261, %v260, 0.0
        %v263 = vrot.slane %v262, 4
        %v264 = vadd.f32 %v262, %v263
        %v265 = vrot.slane %v264, 2
        %v266 = vadd.f32 %v264, %v265
        %v267 = vrot.slane %v266, 1
        %v268 = vadd.f32 %v266, %v267
        %269 = vst [vmem:[%s217] sm:$0x1] %v268
        %s270 = sand.u32 %s100, 1
        %s271 = scalar_lea.sflag [#allocation4], %s270
        %s272 = sand.u32 %s100, 1
        %s273 = scalar_lea.vmem [#allocation7], %s272
        // Predicated region
        $region37: #{tpu_custom_call.1} parent=27 // pred_check
          %p274 = pneg %p110
        $region38: #{tpu_custom_call.1} parent=27 // pred_check_branch
          %276 = sbr.rel (%p274) target = $region40
        $region39: #{tpu_custom_call.1} parent=27 // pred_region
          %278 = vsyncadd %s271, 0
          %s279 = sadd.s32 %s27, %s26
          %s280 = scalar_lea.hbm %s2, %s279
          %s282 = sshll.u32 %s273, 4
          %s283 = int_to_ptr.vmem [resolvable:$true] %s282
          %s284 = sshll.u32 %s280, 4
          %s285 = int_to_ptr.hbm [resolvable:$true] %s284
          %287 = dma.vmem_to_hbm [thread:$0]  %s283, 16, %s285, %s271
        $region40: #{tpu_custom_call.1} parent=27 // pred_fallthru
          _
      $region28: #{tpu_custom_call.1} parent=5 // pred_fallthru
        _
      %p288 = scmp.le.s32.totalorder 2, %s17
      // Predicated region
      $region41: #{tpu_custom_call.1} parent=5 // pred_check
        %p289 = pneg %p288
      $region42: #{tpu_custom_call.1} parent=5 // pred_check_branch
        %291 = sbr.rel (%p289) target = $region44
      $region43: #{tpu_custom_call.1} parent=5 // pred_region
        %s292 = ssub.s32 %s17, 2
        // Predicated region
        $region45: #{tpu_custom_call.1} parent=43 // pred_check
          %p293 = pneg %p116
        $region46: #{tpu_custom_call.1} parent=43 // pred_check_branch
          %295 = sbr.rel (%p293) target = $region48
        $region47: #{tpu_custom_call.1} parent=43 // pred_region
          %s296 = sand.u32 %s101, 1
          %s297 = scalar_lea.sflag [#allocation4], %s296
          %s298 = sand.u32 %s101, 1
          %s299 = scalar_lea.vmem [#allocation7], %s298
          %301 = dma.done %s297, 16
        $region48: #{tpu_custom_call.1} parent=43 // pred_fallthru
          _
      $region44: #{tpu_custom_call.1} parent=5 // pred_fallthru
        _
    $region6: #{tpu_custom_call.1} parent=1 // loop_footer
      %s21 = sadd.s32 1, %s17
    $region7: #{tpu_custom_call.1} parent=1 // loop_footer_branch
      %16 = sbr.rel target = $region3
    $region8: #{tpu_custom_call.1} parent=1 // loop_exit
      _
    %302 = vsyncpa [#allocation3], 1
    %s303 = scalar_lea.sflag [#allocation3], 1
    %304 = vsyncpa %s303, 1
    %305 = vsyncpa [#allocation6], 1
    %s306 = scalar_lea.sflag [#allocation6], 1
    %307 = vsyncpa %s306, 1
    %308 = vsyncpa [#allocation4], 1
    %s309 = scalar_lea.sflag [#allocation4], 1
    %310 = vsyncpa %s309, 1

</llo_original>
